<compile_context>
chip_gen: v6e
topology: v6e:2x2x1
jax: 0.10.0
libtpu: 0.0.40
codegen_flags: <defaults>
</compile_context>

<pallas_src>
import functools

import jax
import jax.numpy as jnp
from jax.experimental import pallas as pl
from jax.experimental.pallas import tpu as pltpu


def _round_up(x, m):
    return -(-x // m) * m


def _mlp_kernel(x_ref, w1_ref, b1_ref, w2_ref, b2_ref, o_ref):
    # x_ref:  (tm, D0)   tile of the (padded) batch
    # w1_ref: (D0, D1)   full first-layer weight (pre-transposed), VMEM-resident
    # b1_ref: (1,  D1)
    # w2_ref: (D1, D2)   full second-layer weight, VMEM-resident
    # b2_ref: (1,  D2)
    # o_ref:  (tm, D2)
    h = jnp.dot(x_ref[...], w1_ref[...], preferred_element_type=jnp.float32)
    h = h + b1_ref[...].astype(jnp.float32)
    h = jnp.maximum(h, 0.0)                       # ReLU
    # Dropout (eval mode) == identity.
    y = jnp.dot(h.astype(w2_ref.dtype), w2_ref[...],
                preferred_element_type=jnp.float32)
    y = y + b2_ref[...].astype(jnp.float32)
    o_ref[...] = y.astype(o_ref.dtype)


@functools.partial(jax.jit, static_argnames=("tm",))
def mlp_forward(x, w1, b1, w2, b2, *, tm=None):
    """Fused MLP forward: relu(x @ w1 + b1) @ w2 + b2 (dropout = eval identity).

    x : (M, D0), w1 : (D0, D1), b1 : (D1,), w2 : (D1, D2), b2 : (D2,)
    """
    M, D0 = x.shape
    D1 = w1.shape[1]
    D2 = w2.shape[1]

    itemsize = jnp.dtype(x.dtype).itemsize
    # Sub-32-bit dtypes pack rows along sublanes: minimum batch tile is
    # 8 (f32) / 16 (bf16) / 32 (int8, fp8) rows.
    min_rows = {4: 8, 2: 16, 1: 32}[itemsize]

    if tm is None:
        # Large tiles keep the MXU busy (128x128 on v5e, 256x256 on v6e/v7x)
        # and amortize the ~0.35 us per-grid-step overhead; keep >=2 grid
        # steps when M allows so v7x's two TensorCores both get work.
        tm = 128
        for cand in (512, 256):
            if M >= 2 * cand:
                tm = cand
                break
        tm = min(tm, _round_up(M, min_rows))
    assert tm % min_rows == 0, f"tm must be a multiple of {min_rows} for this dtype"

    # Pad the batch so the grid covers it exactly; padded rows are sliced off.
    Mp = _round_up(M, tm)
    if Mp != M:
        x = jnp.pad(x, ((0, Mp - M), (0, 0)))

    b1_2d = b1.reshape(1, D1)
    b2_2d = b2.reshape(1, D2)

    w_itemsize = jnp.dtype(w1.dtype).itemsize
    # VMEM budget: x/out tiles double-buffered, weights/biases single-buffered
    # (pl.Buffered(1)), plus f32 intermediates inside the kernel.
    vmem_needed = (
        2 * tm * D0 * itemsize
        + 2 * tm * D2 * itemsize
        + (D0 * D1 + D1 + D1 * D2 + D2) * w_itemsize
        + tm * (D1 + D2) * 4
    )
    vmem_limit = None
    if vmem_needed > 24 * 1024 * 1024:
        # TODO(synk): for very large f32 hidden sizes (~2K+) on v7x's 64 MiB
        # VMEM, tile D1 with an f32 accumulator scratch instead of keeping w2
        # fully resident.
        vmem_limit = min(int(vmem_needed * 1.25), 96 * 1024 * 1024)

    flops = 2 * Mp * (D0 * D1 + D1 * D2)
    bytes_accessed = (
        Mp * D0 * itemsize + Mp * D2 * itemsize
        + (D0 * D1 + D1 + D1 * D2 + D2) * w_itemsize
    )

    grid = (Mp // tm,)
    out = pl.pallas_call(
        _mlp_kernel,
        out_shape=jax.ShapeDtypeStruct((Mp, D2), x.dtype),
        grid_spec=pltpu.PrefetchScalarGridSpec(
            num_scalar_prefetch=0,
            grid=grid,
            in_specs=[
                # x tile: streamed / double-buffered along the batch grid axis.
                pl.BlockSpec((tm, D0), lambda i: (i, 0)),
                # Weights & biases: constant index_map -> resident; single
                # buffer (no pointless double-buffering of large weights).
                pl.BlockSpec((D0, D1), lambda i: (0, 0),
                             pipeline_mode=pl.Buffered(1)),
                pl.BlockSpec((1, D1), lambda i: (0, 0),
                             pipeline_mode=pl.Buffered(1)),
                pl.BlockSpec((D1, D2), lambda i: (0, 0),
                             pipeline_mode=pl.Buffered(1)),
                pl.BlockSpec((1, D2), lambda i: (0, 0),
                             pipeline_mode=pl.Buffered(1)),
            ],
            out_specs=pl.BlockSpec((tm, D2), lambda i: (i, 0)),
        ),
        compiler_params=pltpu.CompilerParams(
            dimension_semantics=("parallel",),
            vmem_limit_bytes=vmem_limit),
        cost_estimate=pl.CostEstimate(
            flops=flops, transcendentals=0, bytes_accessed=bytes_accessed),
    )(x, w1, b1_2d, w2, b2_2d)

    return out[:M] if Mp != M else out


def init_mlp_params(key, units, dtype=jnp.float32):
    """Deterministic init mimicking nn.Linear (uniform(-1/sqrt(in), 1/sqrt(in))).

    Returns weights already transposed to (in_features, out_features).
    """
    params = []
    for u0, u1 in zip(units[:-1], units[1:]):
        key, kw, kb = jax.random.split(key, 3)
        bound = 1.0 / jnp.sqrt(jnp.array(u0, dtype=jnp.float32))
        w = jax.random.uniform(kw, (u0, u1), dtype=dtype,
                               minval=-bound, maxval=bound)
        b = jax.random.uniform(kb, (u1,), dtype=dtype,
                               minval=-bound, maxval=bound)
        params.append((w, b))
    return params


def reference_forward(x, params):
    # Pure-JAX reference of MLPLayers.forward (eval mode):
    # Linear -> ReLU -> Dropout(identity) -> Linear  (trailing ReLU/Dropout removed)
    (w1, b1), (w2, b2) = params
    h = jnp.maximum(x @ w1 + b1, 0.0)
    return h @ w2 + b2


if __name__ == "__main__":
    # Small shapes consistent with the module (units=[in, hidden, out]).
    # batch=200 deliberately exercises the pad-to-tile path.
    units = [128, 256, 128]
    batch = 200

    key = jax.random.PRNGKey(0)
    key, kx = jax.random.split(key)
    x = jax.random.normal(kx, (batch, units[0]), dtype=jnp.float32)

    params = init_mlp_params(key, units)
    (w1, b1), (w2, b2) = params

    out = jax.block_until_ready(mlp_forward(x, w1, b1, w2, b2))

    ref = reference_forward(x, params)
    assert out.shape == (batch, units[-1])
    max_err = float(jnp.max(jnp.abs(out - ref)))
    assert jnp.allclose(out, ref, atol=1e-3, rtol=1e-3), (
        f"mismatch vs reference (max abs err {max_err})")

    print("KERNEL_OK")
</pallas_src>

<mosaic_0001>
module attributes {stable_mosaic.version = 11 : i64} {
  func.func @_mlp_kernel(%arg0: i32, %arg1: memref<128x128xf32, #tpu.memory_space<vmem>>, %arg2: memref<128x256xf32, #tpu.memory_space<vmem>>, %arg3: memref<1x256xf32, #tpu.memory_space<vmem>>, %arg4: memref<256x128xf32, #tpu.memory_space<vmem>>, %arg5: memref<1x128xf32, #tpu.memory_space<vmem>>, %arg6: memref<128x128xf32, #tpu.memory_space<vmem>>) attributes {dimension_semantics = [#tpu.dimension_semantics<parallel>], iteration_bounds = array<i64: 2>, scalar_prefetch = 0 : i64, scratch_operands = 0 : i64, tpu.core_type = #tpu.core_type<tc>, window_params = [{transform_indices = @transform_0, window_bounds = array<i64: 128, 128>}, {pipeline_mode = #tpu.pipeline_mode<synchronous>, transform_indices = @transform_1, window_bounds = array<i64: 128, 256>}, {pipeline_mode = #tpu.pipeline_mode<synchronous>, transform_indices = @transform_2, window_bounds = array<i64: 1, 256>}, {pipeline_mode = #tpu.pipeline_mode<synchronous>, transform_indices = @transform_3, window_bounds = array<i64: 256, 128>}, {pipeline_mode = #tpu.pipeline_mode<synchronous>, transform_indices = @transform_4, window_bounds = array<i64: 1, 128>}, {transform_indices = @transform_5, window_bounds = array<i64: 128, 128>}]} {
    %c0 = arith.constant 0 : index
    %c0_0 = arith.constant 0 : index
    %0 = vector.load %arg1[%c0, %c0_0] : memref<128x128xf32, #tpu.memory_space<vmem>>, vector<128x128xf32>
    %c0_1 = arith.constant 0 : index
    %c0_2 = arith.constant 0 : index
    %1 = vector.load %arg2[%c0_1, %c0_2] : memref<128x256xf32, #tpu.memory_space<vmem>>, vector<128x256xf32>
    %cst = arith.constant dense<0.000000e+00> : vector<128x256xf32>
    %2 = tpu.matmul %0, %1, %cst {dimension_numbers = #tpu.dot_dimension_numbers<[1], [0], [0], [1], [0, 0, 1, 1], [], []>} : vector<128x128xf32>, vector<128x256xf32>, vector<128x256xf32> -> vector<128x256xf32>
    %c0_3 = arith.constant 0 : index
    %c0_4 = arith.constant 0 : index
    %3 = vector.load %arg3[%c0_3, %c0_4] : memref<1x256xf32, #tpu.memory_space<vmem>>, vector<1x256xf32>
    %4 = vector.broadcast %3 : vector<1x256xf32> to vector<128x256xf32>
    %5 = arith.addf %2, %4 : vector<128x256xf32>
    %cst_5 = arith.constant 0.000000e+00 : f32
    %6 = vector.broadcast %cst_5 : f32 to vector<128x256xf32>
    %7 = arith.maximumf %5, %6 : vector<128x256xf32>
    %c0_6 = arith.constant 0 : index
    %c0_7 = arith.constant 0 : index
    %8 = vector.load %arg4[%c0_6, %c0_7] : memref<256x128xf32, #tpu.memory_space<vmem>>, vector<256x128xf32>
    %cst_8 = arith.constant dense<0.000000e+00> : vector<128x128xf32>
    %9 = tpu.matmul %7, %8, %cst_8 {dimension_numbers = #tpu.dot_dimension_numbers<[1], [0], [0], [1], [0, 0, 1, 1], [], []>} : vector<128x256xf32>, vector<256x128xf32>, vector<128x128xf32> -> vector<128x128xf32>
    %c0_9 = arith.constant 0 : index
    %c0_10 = arith.constant 0 : index
    %10 = vector.load %arg5[%c0_9, %c0_10] : memref<1x128xf32, #tpu.memory_space<vmem>>, vector<1x128xf32>
    %11 = vector.broadcast %10 : vector<1x128xf32> to vector<128x128xf32>
    %12 = arith.addf %9, %11 : vector<128x128xf32>
    %c0_11 = arith.constant 0 : index
    %c0_12 = arith.constant 0 : index
    %13 = vector.load %arg6[%c0_11, %c0_12] : memref<128x128xf32, #tpu.memory_space<vmem>>, vector<128x128xf32>
    tpu.vector_store %arg6[%c0_11, %c0_12], %12 {strides = array<i32>} : memref<128x128xf32, #tpu.memory_space<vmem>>, vector<128x128xf32>,
    return
  }
  func.func @transform_0(%arg0: i32) -> (i32, i32) {
    %c0_i32 = arith.constant 0 : i32
    %c0_i32_0 = arith.constant 0 : i32
    return %arg0, %c0_i32 : i32, i32
  }
  func.func @transform_1(%arg0: i32) -> (i32, i32) {
    %c0_i32 = arith.constant 0 : i32
    %c0_i32_0 = arith.constant 0 : i32
    %c0_i32_1 = arith.constant 0 : i32
    return %c0_i32, %c0_i32_0 : i32, i32
  }
  func.func @transform_2(%arg0: i32) -> (i32, i32) {
    %c0_i32 = arith.constant 0 : i32
    %c0_i32_0 = arith.constant 0 : i32
    %c0_i32_1 = arith.constant 0 : i32
    return %c0_i32, %c0_i32_0 : i32, i32
  }
  func.func @transform_3(%arg0: i32) -> (i32, i32) {
    %c0_i32 = arith.constant 0 : i32
    %c0_i32_0 = arith.constant 0 : i32
    %c0_i32_1 = arith.constant 0 : i32
    return %c0_i32, %c0_i32_0 : i32, i32
  }
  func.func @transform_4(%arg0: i32) -> (i32, i32) {
    %c0_i32 = arith.constant 0 : i32
    %c0_i32_0 = arith.constant 0 : i32
    %c0_i32_1 = arith.constant 0 : i32
    return %c0_i32, %c0_i32_0 : i32, i32
  }
  func.func @transform_5(%arg0: i32) -> (i32, i32) {
    %c0_i32 = arith.constant 0 : i32
    %c0_i32_0 = arith.constant 0 : i32
    return %arg0, %c0_i32 : i32, i32
  }
}

</mosaic_0001>

<llo_original>
// kernel: mlp_forward.1
$region0: #{mlp_forward.1}
  #allocation0 [shape = 'u32[]', space=smem, size = 0x4, offset = 0x4, fixed_abs, tag = 'smem constant byte address 0x4 - core index']
  #allocation1 [shape = 'u32[144,128]{1,0:T(1,128)}', space=vmem, size = 0x12000, scoped, tag = 'internal scratch']
  %s0 = inlined_call_operand.vmem [shape: f32[256,128], index: 0, kind: input, shape index: {}]
  %s1 = inlined_call_operand.vmem [shape: f32[128,256], index: 1, kind: input, shape index: {}]
  %s2 = inlined_call_operand.vmem [shape: f32[1,256], index: 2, kind: input, shape index: {}]
  %s3 = inlined_call_operand.hbm [shape: f32[256,128], index: 3, kind: input, shape index: {}]
  %s4 = inlined_call_operand.vmem [shape: f32[1,128], index: 4, kind: input, shape index: {}]
  %s5 = inlined_call_operand.vmem [shape: f32[256,128], index: 5, kind: output, shape index: {}]
  %s6 = sld [smem:[#allocation0]]
  $region57: #{mlp_forward.1} parent=0
    _
  %s8 = ssub.s32 1, %s6
  %s9 = scalar_select 0, %s8, %s6
  $region1: #{mlp_forward.1} parent=0
    #allocation2 [shape = 'u8[131072]{0}', space=vmem, size = 0x20000, scoped, tag = 'input window, operand 3, single buffered']
    #allocation3 [shape = 's32[2]{0}', space=sflag, size = 0x8, scoped, tag = 'scoped memory for mlp_forward.1']
    %10 = vsyncpa [#allocation3], 0
    loop: start=0, step=1, limit=4
    $region2: #{mlp_forward.1} parent=1 // loop_pre_header
      _
    $region3: #{mlp_forward.1} parent=1 // loop_header
      %s12 = sphi 0, %s16
      %p13 = scmp.ge.s32.totalorder %s12, 4
      %s22 = sphi 0, %s24
      %s25 = sphi 0, %s22
      %s26 = sphi 0, %s25
      %s42 = sphi 0, %s26
      %s46 = sphi 0, %s46
      %s48 = sphi 0, %s46
      %s49 = sphi 0, %s48
      %s63 = sphi 0, %s49
      %s67 = sphi 0, %s67
      %s69 = sphi 0, %s67
      %s70 = sphi 0, %s69
      %s84 = sphi 0, %s70
      %s88 = sphi 0, %s88
      %s90 = sphi 0, %s88
      %s91 = sphi 0, %s90
      %s105 = sphi 0, %s91
      %s109 = sphi 0, %s109
      %s111 = sphi 0, %s109
      %s112 = sphi 0, %s111
      %s126 = sphi 0, %s112
      %s132 = sphi 0, %s134
      %s135 = sphi 0, %s132
      %s136 = sphi 0, %s135
      %s152 = sphi 0, %s136
    $region4: #{mlp_forward.1} parent=1 // loop_header_branch
      %15 = sbr.rel (%p13) target = $region8
    $region5: #{mlp_forward.1} parent=1 // loop_body
      %s17 = ssub.s32 %s12, 1
      %s18 = ssub.s32 %s12, 2
      %s19 = sadd.s32 %s12, 1
      %s20 = ssub.s32 %s12, %s19
      %p21 = scmp.eq.s32.totalorder %s20, 0
      %s23 = sadd.s32 %s22, 1
      %s24 = scalar_select %p21, %s22, %s23
      %p27 = pneg %p21
      %p28 = scmp.eq.s32.totalorder %s12, 1
      %p29 = por %p27, %p28
      %p30 = scmp.ne.s32.totalorder %s22, %s25
      %p31 = scmp.eq.s32.totalorder %s12, 0
      %p32 = por %p30, %p31
      %p33 = scmp.ne.s32.totalorder %s22, %s25
      %p34 = scmp.eq.s32.totalorder %s17, 1
      %p35 = por %p33, %p34
      %p36 = scmp.ne.s32.totalorder %s25, %s26
      %p37 = scmp.eq.s32.totalorder %s17, 0
      %p38 = por %p36, %p37
      %p39 = scmp.ne.s32.totalorder %s25, %s26
      %p40 = scmp.eq.s32.totalorder %s18, 1
      %p41 = por %p39, %p40
      %p43 = scmp.ne.s32.totalorder %s26, %s42
      %p44 = scmp.eq.s32.totalorder %s18, 0
      %p45 = por %p43, %p44
      %s47 = sadd.s32 %s46, 1
      %p50 = scmp.eq.s32.totalorder %s12, 1
      %p51 = scmp.ne.s32.totalorder %s46, %s48
      %p52 = scmp.eq.s32.totalorder %s12, 0
      %p53 = por %p51, %p52
      %p54 = scmp.ne.s32.totalorder %s46, %s48
      %p55 = scmp.eq.s32.totalorder %s17, 1
      %p56 = por %p54, %p55
      %p57 = scmp.ne.s32.totalorder %s48, %s49
      %p58 = scmp.eq.s32.totalorder %s17, 0
      %p59 = por %p57, %p58
      %p60 = scmp.ne.s32.totalorder %s48, %s49
      %p61 = scmp.eq.s32.totalorder %s18, 1
      %p62 = por %p60, %p61
      %p64 = scmp.ne.s32.totalorder %s49, %s63
      %p65 = scmp.eq.s32.totalorder %s18, 0
      %p66 = por %p64, %p65
      %s68 = sadd.s32 %s67, 1
      %p71 = scmp.eq.s32.totalorder %s12, 1
      %p72 = scmp.ne.s32.totalorder %s67, %s69
      %p73 = scmp.eq.s32.totalorder %s12, 0
      %p74 = por %p72, %p73
      %p75 = scmp.ne.s32.totalorder %s67, %s69
      %p76 = scmp.eq.s32.totalorder %s17, 1
      %p77 = por %p75, %p76
      %p78 = scmp.ne.s32.totalorder %s69, %s70
      %p79 = scmp.eq.s32.totalorder %s17, 0
      %p80 = por %p78, %p79
      %p81 = scmp.ne.s32.totalorder %s69, %s70
      %p82 = scmp.eq.s32.totalorder %s18, 1
      %p83 = por %p81, %p82
      %p85 = scmp.ne.s32.totalorder %s70, %s84
      %p86 = scmp.eq.s32.totalorder %s18, 0
      %p87 = por %p85, %p86
      %s89 = sadd.s32 %s88, 1
      %p92 = scmp.eq.s32.totalorder %s12, 1
      %p93 = scmp.ne.s32.totalorder %s88, %s90
      %p94 = scmp.eq.s32.totalorder %s12, 0
      %p95 = por %p93, %p94
      %p96 = scmp.ne.s32.totalorder %s88, %s90
      %p97 = scmp.eq.s32.totalorder %s17, 1
      %p98 = por %p96, %p97
      %p99 = scmp.ne.s32.totalorder %s90, %s91
      %p100 = scmp.eq.s32.totalorder %s17, 0
      %p101 = por %p99, %p100
      %p102 = scmp.ne.s32.totalorder %s90, %s91
      %p103 = scmp.eq.s32.totalorder %s18, 1
      %p104 = por %p102, %p103
      %p106 = scmp.ne.s32.totalorder %s91, %s105
      %p107 = scmp.eq.s32.totalorder %s18, 0
      %p108 = por %p106, %p107
      %s110 = sadd.s32 %s109, 1
      %p113 = scmp.eq.s32.totalorder %s12, 1
      %p114 = scmp.ne.s32.totalorder %s109, %s111
      %p115 = scmp.eq.s32.totalorder %s12, 0
      %p116 = por %p114, %p115
      %p117 = scmp.ne.s32.totalorder %s109, %s111
      %p118 = scmp.eq.s32.totalorder %s17, 1
      %p119 = por %p117, %p118
      %p120 = scmp.ne.s32.totalorder %s111, %s112
      %p121 = scmp.eq.s32.totalorder %s17, 0
      %p122 = por %p120, %p121
      %p123 = scmp.ne.s32.totalorder %s111, %s112
      %p124 = scmp.eq.s32.totalorder %s18, 1
      %p125 = por %p123, %p124
      %p127 = scmp.ne.s32.totalorder %s112, %s126
      %p128 = scmp.eq.s32.totalorder %s18, 0
      %p129 = por %p127, %p128
      %s130 = ssub.s32 %s12, %s19
      %p131 = scmp.eq.s32.totalorder %s130, 0
      %s133 = sadd.s32 %s132, 1
      %s134 = scalar_select %p131, %s132, %s133
      %p137 = pneg %p131
      %p138 = scmp.eq.s32.totalorder %s12, 1
      %p139 = por %p137, %p138
      %p140 = scmp.ne.s32.totalorder %s132, %s135
      %p141 = scmp.eq.s32.totalorder %s12, 0
      %p142 = por %p140, %p141
      %p143 = scmp.ne.s32.totalorder %s132, %s135
      %p144 = scmp.eq.s32.totalorder %s17, 1
      %p145 = por %p143, %p144
      %p146 = scmp.ne.s32.totalorder %s135, %s136
      %p147 = scmp.eq.s32.totalorder %s17, 0
      %p148 = por %p146, %p147
      %p149 = scmp.ne.s32.totalorder %s135, %s136
      %p150 = scmp.eq.s32.totalorder %s18, 1
      %p151 = por %p149, %p150
      %p153 = scmp.ne.s32.totalorder %s136, %s152
      %p154 = scmp.eq.s32.totalorder %s18, 0
      %p155 = por %p153, %p154
      %p156 = scmp.le.s32.totalorder 1, %s12
      %p157 = scmp.lt.s32.totalorder %s12, 3
      %p158 = pnand %p156, %p157
      %p159 = pneg %p158
      // Predicated region
      $region9: #{mlp_forward.1} parent=5 // pred_check
        _
      $region10: #{mlp_forward.1} parent=5 // pred_check_branch
        %161 = sbr.rel (%p158) target = $region12
      $region11: #{mlp_forward.1} parent=5 // pred_region
        %s162 = ssub.s32 %s12, 1
        // Predicated region
        $region13: #{mlp_forward.1} parent=11 // pred_check
          %p163 = pneg %p59
        $region14: #{mlp_forward.1} parent=11 // pred_check_branch
          %165 = sbr.rel (%p163) target = $region16
        $region15: #{mlp_forward.1} parent=11 // pred_region
          _
        $region16: #{mlp_forward.1} parent=11 // pred_fallthru
          _
        // Predicated region
        $region17: #{mlp_forward.1} parent=11 // pred_check
          %p166 = pneg %p80
        $region18: #{mlp_forward.1} parent=11 // pred_check_branch
          %168 = sbr.rel (%p166) target = $region20
        $region19: #{mlp_forward.1} parent=11 // pred_region
          _
        $region20: #{mlp_forward.1} parent=11 // pred_fallthru
          _
        // Predicated region
        $region21: #{mlp_forward.1} parent=11 // pred_check
          %p169 = pneg %p101
        $region22: #{mlp_forward.1} parent=11 // pred_check_branch
          %171 = sbr.rel (%p169) target = $region24
        $region23: #{mlp_forward.1} parent=11 // pred_region
          %s173 = ssub.s32 4096, 4096
          %174 = vsyncadd [#allocation3], %s173
          %s175 = sshll.u32 [#allocation2], 4
          %s176 = int_to_ptr.vmem [resolvable:$true] %s175
          %181 = dma.hbm_to_vmem [thread:$0]  %s3, 4096, %s176, [#allocation3], 128, 128, 8
        $region24: #{mlp_forward.1} parent=11 // pred_fallthru
          _
        // Predicated region
        $region25: #{mlp_forward.1} parent=11 // pred_check
          %p182 = pneg %p122
        $region26: #{mlp_forward.1} parent=11 // pred_check_branch
          %184 = sbr.rel (%p182) target = $region28
        $region27: #{mlp_forward.1} parent=11 // pred_region
          _
        $region28: #{mlp_forward.1} parent=11 // pred_fallthru
          _
      $region12: #{mlp_forward.1} parent=5 // pred_fallthru
        _
      %p185 = scmp.lt.s32.totalorder %s12, 2
      // Predicated region
      $region29: #{mlp_forward.1} parent=5 // pred_check
        %p186 = pneg %p185
      $region30: #{mlp_forward.1} parent=5 // pred_check_branch
        %188 = sbr.rel (%p186) target = $region32
      $region31: #{mlp_forward.1} parent=5 // pred_region
        // Predicated region
        $region33: #{mlp_forward.1} parent=31 // pred_check
          %p189 = pneg %p32
        $region34: #{mlp_forward.1} parent=31 // pred_check_branch
          %191 = sbr.rel (%p189) target = $region36
        $region35: #{mlp_forward.1} parent=31 // pred_region
          %s192 = smul.u32 16, %s12
          %p193 = scmp.lt.s32.totalorder %s192, 31
          %s194 = scalar_select %p193, %s192, 31
          %s195 = smul.addr %s194, 8
          %s196 = scalar_lea.vmem %s0, %s195
          %s197 = smul.u32 16, %s12
        $region36: #{mlp_forward.1} parent=31 // pred_fallthru
          _
      $region32: #{mlp_forward.1} parent=5 // pred_fallthru
        _
      %p198 = scmp.le.s32.totalorder 1, %s12
      %p199 = scmp.lt.s32.totalorder %s12, 3
      %p200 = pnand %p198, %p199
      %p201 = pneg %p200
      // Predicated region
      $region37: #{mlp_forward.1} parent=5 // pred_check
        _
      $region38: #{mlp_forward.1} parent=5 // pred_check_branch
        %203 = sbr.rel (%p200) target = $region40
      $region39: #{mlp_forward.1} parent=5 // pred_region
        %s204 = ssub.s32 %s12, 1
        // Predicated region
        $region41: #{mlp_forward.1} parent=39 // pred_check
          %p205 = pneg %p101
        $region42: #{mlp_forward.1} parent=39 // pred_check_branch
          %207 = sbr.rel (%p205) target = $region44
        $region43: #{mlp_forward.1} parent=39 // pred_region
          %208 = dma.done [#allocation3], 4096
        $region44: #{mlp_forward.1} parent=39 // pred_fallthru
          _
        %s209 = smul.u32 16, %s17
        %p210 = scmp.lt.s32.totalorder %s209, 31
        %s211 = scalar_select %p210, %s209, 31
        %s212 = smul.addr %s211, 8
        %s213 = scalar_lea.vmem %s0, %s212
        %p214 = pneg %p38
        %p215 = pneg %p35
        %p216 = pneg %p59
        %p217 = pneg %p56
        %p218 = pneg %p80
        %p219 = pneg %p77
        %p220 = pneg %p101
        %p221 = pneg %p98
        %p222 = pneg %p122
        %p223 = pneg %p119
        %p224 = pneg %p148
        %p225 = pneg %p145
        %s226 = smul.u32 16, %s17
        %p227 = scmp.lt.s32.totalorder %s226, 31
        %s228 = scalar_select %p227, %s226, 31
        %s229 = smul.addr %s228, 8
        %s230 = scalar_lea.vmem %s5, %s229
        %s231 = smul.u32 16, %s17
        %p232 = scmp.lt.s32.totalorder %s231, 31
        %s233 = scalar_select %p232, %s231, 31
        %s234 = smul.addr %s233, 8
        %s235 = scalar_lea.vmem %s0, %s234
        %s236 = smul.u32 16, %s17
        %s237 = smul.u32 16, %s17
        %p238 = scmp.lt.s32.totalorder %s237, 31
        %s239 = scalar_select %p238, %s237, 31
        %s240 = smul.addr %s239, 8
        %s241 = scalar_lea.vmem %s5, %s240
        %s242 = smul.u32 16, %s17
        %v243 = vld [vmem:[%s235] sm:$0xff]
        %v244 = vld [vmem:[%s235 + $0x8] sm:$0xff]
        %v245 = vld [vmem:[%s235 + $0x10] sm:$0xff]
        %v246 = vld [vmem:[%s235 + $0x18] sm:$0xff]
        %v247 = vld [vmem:[%s235 + $0x20] sm:$0xff]
        %v248 = vld [vmem:[%s235 + $0x28] sm:$0xff]
        %v249 = vld [vmem:[%s235 + $0x30] sm:$0xff]
        %v250 = vld [vmem:[%s235 + $0x38] sm:$0xff]
        %v251 = vld [vmem:[%s235 + $0x40] sm:$0xff]
        %v252 = vld [vmem:[%s235 + $0x48] sm:$0xff]
        %v253 = vld [vmem:[%s235 + $0x50] sm:$0xff]
        %v254 = vld [vmem:[%s235 + $0x58] sm:$0xff]
        %v255 = vld [vmem:[%s235 + $0x60] sm:$0xff]
        %v256 = vld [vmem:[%s235 + $0x68] sm:$0xff]
        %v257 = vld [vmem:[%s235 + $0x70] sm:$0xff]
        %v258 = vld [vmem:[%s235 + $0x78] sm:$0xff]
        %v259 = vld [vmem:[%s1] sm:$0xff]
        %v260 = vld [vmem:[%s1 + $0x8] sm:$0xff]
        %v261 = vld [vmem:[%s1 + $0x10] sm:$0xff]
        %v262 = vld [vmem:[%s1 + $0x18] sm:$0xff]
        %v263 = vld [vmem:[%s1 + $0x20] sm:$0xff]
        %v264 = vld [vmem:[%s1 + $0x28] sm:$0xff]
        %v265 = vld [vmem:[%s1 + $0x30] sm:$0xff]
        %v266 = vld [vmem:[%s1 + $0x38] sm:$0xff]
        %v267 = vld [vmem:[%s1 + $0x40] sm:$0xff]
        %v268 = vld [vmem:[%s1 + $0x48] sm:$0xff]
        %v269 = vld [vmem:[%s1 + $0x50] sm:$0xff]
        %v270 = vld [vmem:[%s1 + $0x58] sm:$0xff]
        %v271 = vld [vmem:[%s1 + $0x60] sm:$0xff]
        %v272 = vld [vmem:[%s1 + $0x68] sm:$0xff]
        %v273 = vld [vmem:[%s1 + $0x70] sm:$0xff]
        %v274 = vld [vmem:[%s1 + $0x78] sm:$0xff]
        %v275 = vld [vmem:[%s1 + $0x80] sm:$0xff]
        %v276 = vld [vmem:[%s1 + $0x88] sm:$0xff]
        %v277 = vld [vmem:[%s1 + $0x90] sm:$0xff]
        %v278 = vld [vmem:[%s1 + $0x98] sm:$0xff]
        %v279 = vld [vmem:[%s1 + $0xa0] sm:$0xff]
        %v280 = vld [vmem:[%s1 + $0xa8] sm:$0xff]
        %v281 = vld [vmem:[%s1 + $0xb0] sm:$0xff]
        %v282 = vld [vmem:[%s1 + $0xb8] sm:$0xff]
        %v283 = vld [vmem:[%s1 + $0xc0] sm:$0xff]
        %v284 = vld [vmem:[%s1 + $0xc8] sm:$0xff]
        %v285 = vld [vmem:[%s1 + $0xd0] sm:$0xff]
        %v286 = vld [vmem:[%s1 + $0xd8] sm:$0xff]
        %v287 = vld [vmem:[%s1 + $0xe0] sm:$0xff]
        %v288 = vld [vmem:[%s1 + $0xe8] sm:$0xff]
        %v289 = vld [vmem:[%s1 + $0xf0] sm:$0xff]
        %v290 = vld [vmem:[%s1 + $0xf8] sm:$0xff]
        %v291 = vld [vmem:[%s2] sm:$0x3]
        %v293 = vlaneseq
        %v294 = vshrl.u32 %v293, 7
        %v295 = vsub.s32 0, %v294
        %v296 = vrot.slane %v291, %v295
        %v297 = vlaneseq
        %v298 = vshrl.u32 %v297, 7
        %v299 = vsub.s32 1, %v298
        %v300 = vrot.slane %v291, %v299
        %303 = vmatprep.subr.mxu0 %v290
        %304 = vmatpush1.msra.mxu0 %v289
        %305 = vmatprep.subr.mxu0 %v288
        %306 = vmatpush1.msra.mxu0 %v287
        %307 = vmatprep.subr.mxu0 %v286
        %308 = vmatpush1.msra.mxu0 %v285
        %309 = vmatprep.subr.mxu0 %v284
        %310 = vmatpush1.msra.mxu0 %v283
        %311 = vmatprep.subr.mxu0 %v282
        %312 = vmatpush1.msra.mxu0 %v281
        %313 = vmatprep.subr.mxu0 %v280
        %314 = vmatpush1.msra.mxu0 %v279
        %315 = vmatprep.subr.mxu0 %v278
        %316 = vmatpush1.msra.mxu0 %v277
        %317 = vmatprep.subr.mxu0 %v276
        %318 = vmatpush1.msra.mxu0 %v275
        %319 = vmatprep.subr.mxu0 %v274
        %320 = vmatpush1.msra.mxu0 %v273
        %321 = vmatprep.subr.mxu0 %v272
        %322 = vmatpush1.msra.mxu0 %v271
        %323 = vmatprep.subr.mxu0 %v270
        %324 = vmatpush1.msra.mxu0 %v269
        %325 = vmatprep.subr.mxu0 %v268
        %326 = vmatpush1.msra.mxu0 %v267
        %327 = vmatprep.subr.mxu0 %v266
        %328 = vmatpush1.msra.mxu0 %v265
        %329 = vmatprep.subr.mxu0 %v264
        %330 = vmatpush1.msra.mxu0 %v263
        %331 = vmatprep.subr.mxu0 %v262
        %332 = vmatpush1.msra.mxu0 %v261
        %333 = vmatprep.subr.mxu0 %v260
        %334 = vmatpush1.msra.mxu0 %v259
        %335 = vmatprep.subr.mxu0 0.0
        %336 = vmatpush2.msra.mxu0 0.0
        %337 = vmatprep.subr.mxu0 0.0
        %338 = vmatpush2.msra.mxu0 0.0
        %339 = vmatprep.subr.mxu0 0.0
        %340 = vmatpush2.msra.mxu0 0.0
        %341 = vmatprep.subr.mxu0 0.0
        %342 = vmatpush2.msra.mxu0 0.0
        %343 = vmatprep.subr.mxu0 0.0
        %344 = vmatpush2.msra.mxu0 0.0
        %345 = vmatprep.subr.mxu0 0.0
        %346 = vmatpush2.msra.mxu0 0.0
        %347 = vmatprep.subr.mxu0 0.0
        %348 = vmatpush2.msra.mxu0 0.0
        %349 = vmatprep.subr.mxu0 0.0
        %350 = vmatpush2.msra.mxu0 0.0
        %351 = vmatprep.subr.mxu0 0.0
        %352 = vmatpush2.msra.mxu0 0.0
        %353 = vmatprep.subr.mxu0 0.0
        %354 = vmatpush2.msra.mxu0 0.0
        %355 = vmatprep.subr.mxu0 0.0
        %356 = vmatpush2.msra.mxu0 0.0
        %357 = vmatprep.subr.mxu0 0.0
        %358 = vmatpush2.msra.mxu0 0.0
        %359 = vmatprep.subr.mxu0 0.0
        %360 = vmatpush2.msra.mxu0 0.0
        %361 = vmatprep.subr.mxu0 0.0
        %362 = vmatpush2.msra.mxu0 0.0
        %363 = vmatprep.subr.mxu0 0.0
        %364 = vmatpush2.msra.mxu0 0.0
        %365 = vmatprep.subr.mxu0 0.0
        %366 = vmatpush2.msra.mxu0 0.0
        %367 = vmatprep.mubr.f32.mxu0 0.0
        %368 = vmatmul.mubr.f32.gmra.mxu0 %v243
        %v369 = vpop.f32.mrf.mxu0
        %v370 = vadd.f32 %v296, %v369
        %v371 = vpop.f32.mrf.mxu0
        %v372 = vadd.f32 %v300, %v371
        %373 = vmatprep.mubr.f32.mxu0 0.0
        %374 = vmatmul.mubr.f32.gmra.mxu0 %v244
        %v375 = vpop.f32.mrf.mxu0
        %v376 = vadd.f32 %v296, %v375
        %v377 = vpop.f32.mrf.mxu0
        %v378 = vadd.f32 %v300, %v377
        %379 = vmatprep.mubr.f32.mxu0 0.0
        %380 = vmatmul.mubr.f32.gmra.mxu0 %v245
        %v381 = vpop.f32.mrf.mxu0
        %v382 = vadd.f32 %v296, %v381
        %v383 = vpop.f32.mrf.mxu0
        %v384 = vadd.f32 %v300, %v383
        %385 = vmatprep.mubr.f32.mxu0 0.0
        %386 = vmatmul.mubr.f32.gmra.mxu0 %v246
        %v387 = vpop.f32.mrf.mxu0
        %v388 = vadd.f32 %v296, %v387
        %v389 = vpop.f32.mrf.mxu0
        %v390 = vadd.f32 %v300, %v389
        %391 = vmatprep.mubr.f32.mxu0 0.0
        %392 = vmatmul.mubr.f32.gmra.mxu0 %v247
        %v393 = vpop.f32.mrf.mxu0
        %v394 = vadd.f32 %v296, %v393
        %v395 = vpop.f32.mrf.mxu0
        %v396 = vadd.f32 %v300, %v395
        %397 = vmatprep.mubr.f32.mxu0 0.0
        %398 = vmatmul.mubr.f32.gmra.mxu0 %v248
        %v399 = vpop.f32.mrf.mxu0
        %v400 = vadd.f32 %v296, %v399
        %v401 = vpop.f32.mrf.mxu0
        %v402 = vadd.f32 %v300, %v401
        %403 = vmatprep.mubr.f32.mxu0 0.0
        %404 = vmatmul.mubr.f32.gmra.mxu0 %v249
        %v405 = vpop.f32.mrf.mxu0
        %v406 = vadd.f32 %v296, %v405
        %v407 = vpop.f32.mrf.mxu0
        %v408 = vadd.f32 %v300, %v407
        %409 = vmatprep.mubr.f32.mxu0 0.0
        %410 = vmatmul.mubr.f32.gmra.mxu0 %v250
        %v411 = vpop.f32.mrf.mxu0
        %v412 = vadd.f32 %v296, %v411
        %v413 = vpop.f32.mrf.mxu0
        %v414 = vadd.f32 %v300, %v413
        %415 = vmatprep.mubr.f32.mxu0 0.0
        %416 = vmatmul.mubr.f32.gmra.mxu0 %v251
        %v417 = vpop.f32.mrf.mxu0
        %v418 = vadd.f32 %v296, %v417
        %v419 = vpop.f32.mrf.mxu0
        %v420 = vadd.f32 %v300, %v419
        %421 = vmatprep.mubr.f32.mxu0 0.0
        %422 = vmatmul.mubr.f32.gmra.mxu0 %v252
        %v423 = vpop.f32.mrf.mxu0
        %v424 = vadd.f32 %v296, %v423
        %v425 = vpop.f32.mrf.mxu0
        %v426 = vadd.f32 %v300, %v425
        %427 = vmatprep.mubr.f32.mxu0 0.0
        %428 = vmatmul.mubr.f32.gmra.mxu0 %v253
        %v429 = vpop.f32.mrf.mxu0
        %v430 = vadd.f32 %v296, %v429
        %v431 = vpop.f32.mrf.mxu0
        %v432 = vadd.f32 %v300, %v431
        %433 = vmatprep.mubr.f32.mxu0 0.0
        %434 = vmatmul.mubr.f32.gmra.mxu0 %v254
        %v435 = vpop.f32.mrf.mxu0
        %v436 = vadd.f32 %v296, %v435
        %v437 = vpop.f32.mrf.mxu0
        %v438 = vadd.f32 %v300, %v437
        %439 = vmatprep.mubr.f32.mxu0 0.0
        %440 = vmatmul.mubr.f32.gmra.mxu0 %v255
        %v441 = vpop.f32.mrf.mxu0
        %v442 = vadd.f32 %v296, %v441
        %v443 = vpop.f32.mrf.mxu0
        %v444 = vadd.f32 %v300, %v443
        %445 = vmatprep.mubr.f32.mxu0 0.0
        %446 = vmatmul.mubr.f32.gmra.mxu0 %v256
        %v447 = vpop.f32.mrf.mxu0
        %v448 = vadd.f32 %v296, %v447
        %v449 = vpop.f32.mrf.mxu0
        %v450 = vadd.f32 %v300, %v449
        %451 = vmatprep.mubr.f32.mxu0 0.0
        %452 = vmatmul.mubr.f32.gmra.mxu0 %v257
        %v453 = vpop.f32.mrf.mxu0
        %v454 = vadd.f32 %v296, %v453
        %v455 = vpop.f32.mrf.mxu0
        %v456 = vadd.f32 %v300, %v455
        %457 = vmatprep.mubr.f32.mxu0 0.0
        %458 = vmatmul.mubr.f32.gmra.mxu0 %v258
        %v459 = vpop.f32.mrf.mxu0
        %v460 = vadd.f32 %v296, %v459
        %v461 = vpop.f32.mrf.mxu0
        %v462 = vadd.f32 %v300, %v461
        %463 = vdwg.mxu0
        %v464 = vmax.f32 %v370, 0.0
        %v465 = vmax.f32 %v372, 0.0
        %v466 = vmax.f32 %v376, 0.0
        %v467 = vmax.f32 %v378, 0.0
        %v468 = vmax.f32 %v382, 0.0
        %v469 = vmax.f32 %v384, 0.0
        %v470 = vmax.f32 %v388, 0.0
        %v471 = vmax.f32 %v390, 0.0
        %v472 = vmax.f32 %v394, 0.0
        %v473 = vmax.f32 %v396, 0.0
        %v474 = vmax.f32 %v400, 0.0
        %v475 = vmax.f32 %v402, 0.0
        %v476 = vmax.f32 %v406, 0.0
        %v477 = vmax.f32 %v408, 0.0
        %v478 = vmax.f32 %v412, 0.0
        %v479 = vmax.f32 %v414, 0.0
        %v480 = vmax.f32 %v418, 0.0
        %v481 = vmax.f32 %v420, 0.0
        %v482 = vmax.f32 %v424, 0.0
        %v483 = vmax.f32 %v426, 0.0
        %v484 = vmax.f32 %v430, 0.0
        %v485 = vmax.f32 %v432, 0.0
        %v486 = vmax.f32 %v436, 0.0
        %v487 = vmax.f32 %v438, 0.0
        %v488 = vmax.f32 %v442, 0.0
        %v489 = vmax.f32 %v444, 0.0
        %v490 = vmax.f32 %v448, 0.0
        %v491 = vmax.f32 %v450, 0.0
        %v492 = vmax.f32 %v454, 0.0
        %v493 = vmax.f32 %v456, 0.0
        %v494 = vmax.f32 %v460, 0.0
        %v495 = vmax.f32 %v462, 0.0
        %v496 = vld [vmem:[#allocation2] sm:$0xff]
        %v497 = vld [vmem:[#allocation2 + $0x8] sm:$0xff]
        %v498 = vld [vmem:[#allocation2 + $0x10] sm:$0xff]
        %v499 = vld [vmem:[#allocation2 + $0x18] sm:$0xff]
        %v500 = vld [vmem:[#allocation2 + $0x20] sm:$0xff]
        %v501 = vld [vmem:[#allocation2 + $0x28] sm:$0xff]
        %v502 = vld [vmem:[#allocation2 + $0x30] sm:$0xff]
        %v503 = vld [vmem:[#allocation2 + $0x38] sm:$0xff]
        %v504 = vld [vmem:[#allocation2 + $0x40] sm:$0xff]
        %v505 = vld [vmem:[#allocation2 + $0x48] sm:$0xff]
        %v506 = vld [vmem:[#allocation2 + $0x50] sm:$0xff]
        %v507 = vld [vmem:[#allocation2 + $0x58] sm:$0xff]
        %v508 = vld [vmem:[#allocation2 + $0x60] sm:$0xff]
        %v509 = vld [vmem:[#allocation2 + $0x68] sm:$0xff]
        %v510 = vld [vmem:[#allocation2 + $0x70] sm:$0xff]
        %v511 = vld [vmem:[#allocation2 + $0x78] sm:$0xff]
        %v512 = vld [vmem:[#allocation2 + $0x80] sm:$0xff]
        %v513 = vld [vmem:[#allocation2 + $0x88] sm:$0xff]
        %v514 = vld [vmem:[#allocation2 + $0x90] sm:$0xff]
        %v515 = vld [vmem:[#allocation2 + $0x98] sm:$0xff]
        %v516 = vld [vmem:[#allocation2 + $0xa0] sm:$0xff]
        %v517 = vld [vmem:[#allocation2 + $0xa8] sm:$0xff]
        %v518 = vld [vmem:[#allocation2 + $0xb0] sm:$0xff]
        %v519 = vld [vmem:[#allocation2 + $0xb8] sm:$0xff]
        %v520 = vld [vmem:[#allocation2 + $0xc0] sm:$0xff]
        %v521 = vld [vmem:[#allocation2 + $0xc8] sm:$0xff]
        %v522 = vld [vmem:[#allocation2 + $0xd0] sm:$0xff]
        %v523 = vld [vmem:[#allocation2 + $0xd8] sm:$0xff]
        %v524 = vld [vmem:[#allocation2 + $0xe0] sm:$0xff]
        %v525 = vld [vmem:[#allocation2 + $0xe8] sm:$0xff]
        %v526 = vld [vmem:[#allocation2 + $0xf0] sm:$0xff]
        %v527 = vld [vmem:[#allocation2 + $0xf8] sm:$0xff]
        %v528 = vld [vmem:[%s4] sm:$0x1]
        %v530 = vlaneseq
        %v531 = vshrl.u32 %v530, 7
        %v532 = vsub.s32 0, %v531
        %v533 = vrot.slane %v528, %v532
        %535 = vmatprep.subr.mxu0 0.0
        %536 = vmatpush1.msra.mxu0 %v511
        %537 = vmatprep.subr.mxu0 0.0
        %538 = vmatpush1.msra.mxu0 %v510
        %539 = vmatprep.subr.mxu0 0.0
        %540 = vmatpush1.msra.mxu0 %v509
        %541 = vmatprep.subr.mxu0 0.0
        %542 = vmatpush1.msra.mxu0 %v508
        %543 = vmatprep.subr.mxu0 0.0
        %544 = vmatpush1.msra.mxu0 %v507
        %545 = vmatprep.subr.mxu0 0.0
        %546 = vmatpush1.msra.mxu0 %v506
        %547 = vmatprep.subr.mxu0 0.0
        %548 = vmatpush1.msra.mxu0 %v505
        %549 = vmatprep.subr.mxu0 0.0
        %550 = vmatpush1.msra.mxu0 %v504
        %551 = vmatprep.subr.mxu0 0.0
        %552 = vmatpush1.msra.mxu0 %v503
        %553 = vmatprep.subr.mxu0 0.0
        %554 = vmatpush1.msra.mxu0 %v502
        %555 = vmatprep.subr.mxu0 0.0
        %556 = vmatpush1.msra.mxu0 %v501
        %557 = vmatprep.subr.mxu0 0.0
        %558 = vmatpush1.msra.mxu0 %v500
        %559 = vmatprep.subr.mxu0 0.0
        %560 = vmatpush1.msra.mxu0 %v499
        %561 = vmatprep.subr.mxu0 0.0
        %562 = vmatpush1.msra.mxu0 %v498
        %563 = vmatprep.subr.mxu0 0.0
        %564 = vmatpush1.msra.mxu0 %v497
        %565 = vmatprep.subr.mxu0 0.0
        %566 = vmatpush1.msra.mxu0 %v496
        %567 = vmatprep.subr.mxu0 0.0
        %568 = vmatpush2.msra.mxu0 %v527
        %569 = vmatprep.subr.mxu0 0.0
        %570 = vmatpush2.msra.mxu0 %v526
        %571 = vmatprep.subr.mxu0 0.0
        %572 = vmatpush2.msra.mxu0 %v525
        %573 = vmatprep.subr.mxu0 0.0
        %574 = vmatpush2.msra.mxu0 %v524
        %575 = vmatprep.subr.mxu0 0.0
        %576 = vmatpush2.msra.mxu0 %v523
        %577 = vmatprep.subr.mxu0 0.0
        %578 = vmatpush2.msra.mxu0 %v522
        %579 = vmatprep.subr.mxu0 0.0
        %580 = vmatpush2.msra.mxu0 %v521
        %581 = vmatprep.subr.mxu0 0.0
        %582 = vmatpush2.msra.mxu0 %v520
        %583 = vmatprep.subr.mxu0 0.0
        %584 = vmatpush2.msra.mxu0 %v519
        %585 = vmatprep.subr.mxu0 0.0
        %586 = vmatpush2.msra.mxu0 %v518
        %587 = vmatprep.subr.mxu0 0.0
        %588 = vmatpush2.msra.mxu0 %v517
        %589 = vmatprep.subr.mxu0 0.0
        %590 = vmatpush2.msra.mxu0 %v516
        %591 = vmatprep.subr.mxu0 0.0
        %592 = vmatpush2.msra.mxu0 %v515
        %593 = vmatprep.subr.mxu0 0.0
        %594 = vmatpush2.msra.mxu0 %v514
        %595 = vmatprep.subr.mxu0 0.0
        %596 = vmatpush2.msra.mxu0 %v513
        %597 = vmatprep.subr.mxu0 0.0
        %598 = vmatpush2.msra.mxu0 %v512
        %599 = vmatprep.mubr.f32.mxu0 %v465
        %600 = vmatmul.mubr.f32.gmra.mxu0 %v464
        %v601 = vpop.f32.mrf.mxu0
        %v602 = vadd.f32 %v533, %v601
        %v603 = vpop.f32.mrf.mxu0
        %604 = vmatprep.mubr.f32.mxu0 %v467
        %605 = vmatmul.mubr.f32.gmra.mxu0 %v466
        %v606 = vpop.f32.mrf.mxu0
        %v607 = vadd.f32 %v533, %v606
        %v608 = vpop.f32.mrf.mxu0
        %609 = vmatprep.mubr.f32.mxu0 %v469
        %610 = vmatmul.mubr.f32.gmra.mxu0 %v468
        %v611 = vpop.f32.mrf.mxu0
        %v612 = vadd.f32 %v533, %v611
        %v613 = vpop.f32.mrf.mxu0
        %614 = vmatprep.mubr.f32.mxu0 %v471
        %615 = vmatmul.mubr.f32.gmra.mxu0 %v470
        %v616 = vpop.f32.mrf.mxu0
        %v617 = vadd.f32 %v533, %v616
        %v618 = vpop.f32.mrf.mxu0
        %619 = vmatprep.mubr.f32.mxu0 %v473
        %620 = vmatmul.mubr.f32.gmra.mxu0 %v472
        %v621 = vpop.f32.mrf.mxu0
        %v622 = vadd.f32 %v533, %v621
        %v623 = vpop.f32.mrf.mxu0
        %624 = vmatprep.mubr.f32.mxu0 %v475
        %625 = vmatmul.mubr.f32.gmra.mxu0 %v474
        %v626 = vpop.f32.mrf.mxu0
        %v627 = vadd.f32 %v533, %v626
        %v628 = vpop.f32.mrf.mxu0
        %629 = vmatprep.mubr.f32.mxu0 %v477
        %630 = vmatmul.mubr.f32.gmra.mxu0 %v476
        %v631 = vpop.f32.mrf.mxu0
        %v632 = vadd.f32 %v533, %v631
        %v633 = vpop.f32.mrf.mxu0
        %634 = vmatprep.mubr.f32.mxu0 %v479
        %635 = vmatmul.mubr.f32.gmra.mxu0 %v478
        %v636 = vpop.f32.mrf.mxu0
        %v637 = vadd.f32 %v533, %v636
        %v638 = vpop.f32.mrf.mxu0
        %639 = vmatprep.mubr.f32.mxu0 %v481
        %640 = vmatmul.mubr.f32.gmra.mxu0 %v480
        %v641 = vpop.f32.mrf.mxu0
        %v642 = vadd.f32 %v533, %v641
        %v643 = vpop.f32.mrf.mxu0
        %644 = vmatprep.mubr.f32.mxu0 %v483
        %645 = vmatmul.mubr.f32.gmra.mxu0 %v482
        %v646 = vpop.f32.mrf.mxu0
        %v647 = vadd.f32 %v533, %v646
        %v648 = vpop.f32.mrf.mxu0
        %649 = vmatprep.mubr.f32.mxu0 %v485
        %650 = vmatmul.mubr.f32.gmra.mxu0 %v484
        %v651 = vpop.f32.mrf.mxu0
        %v652 = vadd.f32 %v533, %v651
        %v653 = vpop.f32.mrf.mxu0
        %654 = vmatprep.mubr.f32.mxu0 %v487
        %655 = vmatmul.mubr.f32.gmra.mxu0 %v486
        %v656 = vpop.f32.mrf.mxu0
        %v657 = vadd.f32 %v533, %v656
        %v658 = vpop.f32.mrf.mxu0
        %659 = vmatprep.mubr.f32.mxu0 %v489
        %660 = vmatmul.mubr.f32.gmra.mxu0 %v488
        %v661 = vpop.f32.mrf.mxu0
        %v662 = vadd.f32 %v533, %v661
        %v663 = vpop.f32.mrf.mxu0
        %664 = vmatprep.mubr.f32.mxu0 %v491
        %665 = vmatmul.mubr.f32.gmra.mxu0 %v490
        %v666 = vpop.f32.mrf.mxu0
        %v667 = vadd.f32 %v533, %v666
        %v668 = vpop.f32.mrf.mxu0
        %669 = vmatprep.mubr.f32.mxu0 %v493
        %670 = vmatmul.mubr.f32.gmra.mxu0 %v492
        %v671 = vpop.f32.mrf.mxu0
        %v672 = vadd.f32 %v533, %v671
        %v673 = vpop.f32.mrf.mxu0
        %674 = vmatprep.mubr.f32.mxu0 %v495
        %675 = vmatmul.mubr.f32.gmra.mxu0 %v494
        %v676 = vpop.f32.mrf.mxu0
        %v677 = vadd.f32 %v533, %v676
        %v678 = vpop.f32.mrf.mxu0
        %679 = vdwg.mxu0
        %680 = vst [vmem:[%s241] sm:$0xff] %v602
        %681 = vst [vmem:[%s241 + $0x8] sm:$0xff] %v607
        %682 = vst [vmem:[%s241 + $0x10] sm:$0xff] %v612
        %683 = vst [vmem:[%s241 + $0x18] sm:$0xff] %v617
        %684 = vst [vmem:[%s241 + $0x20] sm:$0xff] %v622
        %685 = vst [vmem:[%s241 + $0x28] sm:$0xff] %v627
        %686 = vst [vmem:[%s241 + $0x30] sm:$0xff] %v632
        %687 = vst [vmem:[%s241 + $0x38] sm:$0xff] %v637
        %688 = vst [vmem:[%s241 + $0x40] sm:$0xff] %v642
        %689 = vst [vmem:[%s241 + $0x48] sm:$0xff] %v647
        %690 = vst [vmem:[%s241 + $0x50] sm:$0xff] %v652
        %691 = vst [vmem:[%s241 + $0x58] sm:$0xff] %v657
        %692 = vst [vmem:[%s241 + $0x60] sm:$0xff] %v662
        %693 = vst [vmem:[%s241 + $0x68] sm:$0xff] %v667
        %694 = vst [vmem:[%s241 + $0x70] sm:$0xff] %v672
        %695 = vst [vmem:[%s241 + $0x78] sm:$0xff] %v677
        %s696 = smul.u32 16, %s17
        %p697 = scmp.lt.s32.totalorder %s696, 31
        %s698 = scalar_select %p697, %s696, 31
        %s699 = smul.addr %s698, 8
        %s700 = scalar_lea.vmem %s5, %s699
        // Predicated region
        $region45: #{mlp_forward.1} parent=39 // pred_check
          %p701 = pneg %p145
        $region46: #{mlp_forward.1} parent=39 // pred_check_branch
          %703 = sbr.rel (%p701) target = $region48
        $region47: #{mlp_forward.1} parent=39 // pred_region
          %s704 = smul.u32 16, %s17
        $region48: #{mlp_forward.1} parent=39 // pred_fallthru
          _
      $region40: #{mlp_forward.1} parent=5 // pred_fallthru
        _
      %p705 = scmp.le.s32.totalorder 2, %s12
      // Predicated region
      $region49: #{mlp_forward.1} parent=5 // pred_check
        %p706 = pneg %p705
      $region50: #{mlp_forward.1} parent=5 // pred_check_branch
        %708 = sbr.rel (%p706) target = $region52
      $region51: #{mlp_forward.1} parent=5 // pred_region
        %s709 = ssub.s32 %s12, 2
        // Predicated region
        $region53: #{mlp_forward.1} parent=51 // pred_check
          %p710 = pneg %p151
        $region54: #{mlp_forward.1} parent=51 // pred_check_branch
          %712 = sbr.rel (%p710) target = $region56
        $region55: #{mlp_forward.1} parent=51 // pred_region
          %s713 = smul.u32 16, %s18
          %p714 = scmp.lt.s32.totalorder %s713, 31
          %s715 = scalar_select %p714, %s713, 31
          %s716 = smul.addr %s715, 8
          %s717 = scalar_lea.vmem %s5, %s716
        $region56: #{mlp_forward.1} parent=51 // pred_fallthru
          _
      $region52: #{mlp_forward.1} parent=5 // pred_fallthru
        _
    $region6: #{mlp_forward.1} parent=1 // loop_footer
      %s16 = sadd.s32 1, %s12
    $region7: #{mlp_forward.1} parent=1 // loop_footer_branch
      %11 = sbr.rel target = $region3
    $region8: #{mlp_forward.1} parent=1 // loop_exit
      _
    %718 = vsyncpa [#allocation3], 1
    %s719 = scalar_lea.sflag [#allocation3], 1
    %720 = vsyncpa %s719, 1

</llo_original>
